<compile_context>
chip_gen: v6e
topology: v6e:2x2x1
jax: 0.10.0
libtpu: 0.0.40
codegen_flags: <defaults>
</compile_context>

<pallas_src>
import functools

import jax
import jax.numpy as jnp
from jax import lax
from jax.experimental import pallas as pl
from jax.experimental.pallas import tpu as pltpu


def mlp_kernel(xt_ref, w1_ref, b1_ref, w2_ref, b2_ref, w3_ref, b3_ref, o_ref,
               *, sub_bn):
    # xt_ref: [inp_dim, bm]   (feature-major: batch on the lane axis)
    # w*:     [out, in] (PyTorch orientation), b*: [out, 1] f32
    # o_ref:  [out_dim, bm]   (lane-dense output tile)
    w1 = w1_ref[...].astype(jnp.bfloat16)
    w2 = w2_ref[...].astype(jnp.bfloat16)
    w3 = w3_ref[...].astype(jnp.bfloat16)
    b1 = b1_ref[...]
    b2 = b2_ref[...]
    b3 = b3_ref[...]

    bm = o_ref.shape[-1]
    n_sub = bm // sub_bn  # wrapper guarantees exact divisibility

    def body(j, carry):
        c0 = pl.multiple_of(j * sub_bn, sub_bn)
        x = xt_ref[:, pl.ds(c0, sub_bn)].astype(jnp.bfloat16)     # [inp, sub]

        # layer 1: [hid, inp] @ [inp, sub] -> [hid, sub]
        h1 = jnp.dot(w1, x, preferred_element_type=jnp.float32)
        h1 = jnp.maximum(h1 + b1, 0.0)                            # f32 bias+ReLU

        # layer 2: [hid, hid] @ [hid, sub] -> [hid, sub]
        h2 = jnp.dot(w2, h1.astype(jnp.bfloat16),
                     preferred_element_type=jnp.float32)
        h2 = jnp.maximum(h2 + b2, 0.0)

        # head: [out, hid] @ [hid, sub] -> [out, sub]
        y = jnp.dot(w3, h2.astype(jnp.bfloat16),
                    preferred_element_type=jnp.float32)
        o_ref[:, pl.ds(c0, sub_bn)] = (y + b3).astype(o_ref.dtype)
        return carry

    # Short fixed trip count -> unroll for LLO visibility; the per-iteration
    # store to o_ref bounds the h1/h2 live ranges.
    lax.fori_loop(0, n_sub, body, 0, unroll=True)


def _choose_bm(B, bm_req, min_steps=2):
    """Pick a batch tile: as large as requested, multiple of 128 (or == B),
    but guaranteeing >= min_steps grid steps so the v7x megacore split has
    work for both TensorCores."""
    if B <= 128 or min_steps <= 1:
        cap = B
    else:
        cap = 128 * pl.cdiv(pl.cdiv(B, min_steps), 128)
    bm = min(bm_req, cap)
    if bm >= B:
        return B
    return min(B, max(128, (bm // 128) * 128))


def _choose_sub_bn(bm):
    """Sub-tile width for the in-kernel loop (bounds vreg live ranges)."""
    if bm <= 512:
        return bm
    for s in (512, 256, 128):
        if bm % s == 0:
            return s
    return bm


def mlp_forward(x, params, *, bm=2048, min_steps=2,
                x_feature_major=False, out_feature_major=False):
    """Forward pass of MLP(inp_dim, hid): fc(ReLU(W2 ReLU(W1 x + b1) + b2)) + b3.

    x: [B, inp_dim] (PyTorch layout) or [inp_dim, B] if x_feature_major=True.
    params: w*: [out_features, in_features] (bf16 recommended), b*: [out, 1] f32.
    Returns [B, out_dim] float32 (or [out_dim, B] if out_feature_major=True,
    which skips a whole extra XLA transpose launch).
    """
    if x_feature_major:
        xt = x
        inp_dim, B = x.shape
    else:
        B, inp_dim = x.shape
        xt = x.T  # tiny; pass x_feature_major=True to avoid it entirely
    hid = params["w1"].shape[0]
    out_dim = params["w3"].shape[0]

    bm = _choose_bm(B, bm, min_steps)
    sub_bn = _choose_sub_bn(bm)
    grid = (pl.cdiv(B, bm),)

    bytes_accessed = (
        xt.size * xt.dtype.itemsize
        + sum(int(params[k].size) * params[k].dtype.itemsize for k in params)
        + out_dim * B * 4
    )
    flops = 2 * B * (inp_dim * hid + hid * hid + hid * out_dim)

    out_t = pl.pallas_call(
        functools.partial(mlp_kernel, sub_bn=sub_bn),
        out_shape=jax.ShapeDtypeStruct((out_dim, B), jnp.float32),
        grid_spec=pltpu.PrefetchScalarGridSpec(
            num_scalar_prefetch=0,
            grid=grid,
            in_specs=[
                pl.BlockSpec((inp_dim, bm), lambda i: (0, i)),    # x (feature-major)
                pl.BlockSpec((hid, inp_dim), lambda i: (0, 0)),   # w1 (resident)
                pl.BlockSpec((hid, 1), lambda i: (0, 0)),         # b1
                pl.BlockSpec((hid, hid), lambda i: (0, 0)),       # w2
                pl.BlockSpec((hid, 1), lambda i: (0, 0)),         # b2
                pl.BlockSpec((out_dim, hid), lambda i: (0, 0)),   # w3
                pl.BlockSpec((out_dim, 1), lambda i: (0, 0)),     # b3
            ],
            out_specs=pl.BlockSpec((out_dim, bm), lambda i: (0, i)),
        ),
        compiler_params=pltpu.CompilerParams(
            dimension_semantics=("parallel",),   # megacore split on v7x
        ),
        cost_estimate=pl.CostEstimate(
            flops=flops, transcendentals=0, bytes_accessed=bytes_accessed),
    )(xt, params["w1"], params["b1"], params["w2"], params["b2"],
      params["w3"], params["b3"])

    if out_feature_major:
        return out_t            # [out_dim, B]
    return out_t.T              # [B, out_dim], matching the PyTorch module


def init_params(key, inp_dim, hid=32, out_dim=2):
    """nn.Linear-style init (uniform +/- 1/sqrt(fan_in)), PyTorch [out, in] layout.
    Weights stored bf16 (MXU-native), biases f32 (added post f32 accumulation)."""
    ks = jax.random.split(key, 6)

    def linear(kw, kb, fan_in, fan_out):
        bound = 1.0 / float(jnp.sqrt(jnp.float32(fan_in)))
        w = jax.random.uniform(kw, (fan_out, fan_in), jnp.float32, -bound, bound)
        b = jax.random.uniform(kb, (fan_out, 1), jnp.float32, -bound, bound)
        return w.astype(jnp.bfloat16), b

    w1, b1 = linear(ks[0], ks[1], inp_dim, hid)
    w2, b2 = linear(ks[2], ks[3], hid, hid)
    w3, b3 = linear(ks[4], ks[5], hid, out_dim)
    return {"w1": w1, "b1": b1, "w2": w2, "b2": b2, "w3": w3, "b3": b3}


def mlp_ref(x, p):
    """Pure-JAX reference mimicking the kernel's precision policy
    (bf16 matmul inputs, f32 accumulation, f32 bias + ReLU). x: [B, inp_dim]."""
    hp = lax.Precision.HIGHEST
    f32 = jnp.float32
    xf = x.astype(jnp.bfloat16).astype(f32)
    w1, w2, w3 = (p[k].astype(jnp.bfloat16).astype(f32) for k in ("w1", "w2", "w3"))
    b1, b2, b3 = (p[k].astype(f32).reshape(1, -1) for k in ("b1", "b2", "b3"))
    h1 = jnp.maximum(jnp.dot(xf, w1.T, precision=hp) + b1, 0.0)
    h1 = h1.astype(jnp.bfloat16).astype(f32)
    h2 = jnp.maximum(jnp.dot(h1, w2.T, precision=hp) + b2, 0.0)
    h2 = h2.astype(jnp.bfloat16).astype(f32)
    return jnp.dot(h2, w3.T, precision=hp) + b3


if __name__ == "__main__":
    key = jax.random.PRNGKey(0)
    k_x, k_p = jax.random.split(key)

    # Small problem consistent with the module: MLP(inp_dim=16, hid=32) -> 2.
    # B=1024 keeps the kernel tiny but still exercises the tiled grid
    # (>=2 "parallel" steps so both v7x TensorCores get work).
    B, inp_dim, hid, out_dim = 1024, 16, 32, 2
    x = jax.random.normal(k_x, (B, inp_dim), jnp.float32).astype(jnp.bfloat16)
    params = init_params(k_p, inp_dim, hid=hid, out_dim=out_dim)

    fwd = jax.jit(functools.partial(mlp_forward, bm=2048))
    out = jax.block_until_ready(fwd(x, params))

    ref = mlp_ref(x, params)
    assert out.shape == (B, out_dim), out.shape
    max_err = float(jnp.max(jnp.abs(out - ref)))
    assert jnp.allclose(out, ref, atol=5e-4, rtol=1e-3), f"mismatch: {max_err}"

    # Feature-major fast path (no input/output transposes around the kernel).
    fwd_fm = jax.jit(functools.partial(mlp_forward, bm=2048,
                                       x_feature_major=True,
                                       out_feature_major=True))
    out_fm = jax.block_until_ready(fwd_fm(x.T, params))
    assert out_fm.shape == (out_dim, B)
    assert jnp.allclose(out_fm.T, ref, atol=5e-4, rtol=1e-3)

    print("KERNEL_OK")
</pallas_src>

<mosaic_0001>
module attributes {stable_mosaic.version = 11 : i64} {
  func.func @mlp_kernel(%arg0: i32, %arg1: memref<16x512xbf16, #tpu.memory_space<vmem>>, %arg2: memref<32x16xbf16, #tpu.memory_space<vmem>>, %arg3: memref<32x1xf32, #tpu.memory_space<vmem>>, %arg4: memref<32x32xbf16, #tpu.memory_space<vmem>>, %arg5: memref<32x1xf32, #tpu.memory_space<vmem>>, %arg6: memref<2x32xbf16, #tpu.memory_space<vmem>>, %arg7: memref<2x1xf32, #tpu.memory_space<vmem>>, %arg8: memref<2x512xf32, #tpu.memory_space<vmem>>) attributes {dimension_semantics = [#tpu.dimension_semantics<parallel>], iteration_bounds = array<i64: 2>, scalar_prefetch = 0 : i64, scratch_operands = 0 : i64, tpu.core_type = #tpu.core_type<tc>, window_params = [{transform_indices = @transform_0, window_bounds = array<i64: 16, 512>}, {pipeline_mode = #tpu.pipeline_mode<synchronous>, transform_indices = @transform_1, window_bounds = array<i64: 32, 16>}, {pipeline_mode = #tpu.pipeline_mode<synchronous>, transform_indices = @transform_2, window_bounds = array<i64: 32, 1>}, {pipeline_mode = #tpu.pipeline_mode<synchronous>, transform_indices = @transform_3, window_bounds = array<i64: 32, 32>}, {pipeline_mode = #tpu.pipeline_mode<synchronous>, transform_indices = @transform_4, window_bounds = array<i64: 32, 1>}, {pipeline_mode = #tpu.pipeline_mode<synchronous>, transform_indices = @transform_5, window_bounds = array<i64: 2, 32>}, {pipeline_mode = #tpu.pipeline_mode<synchronous>, transform_indices = @transform_6, window_bounds = array<i64: 2, 1>}, {transform_indices = @transform_7, window_bounds = array<i64: 2, 512>}]} {
    %c0 = arith.constant 0 : index
    %c0_0 = arith.constant 0 : index
    %0 = vector.load %arg2[%c0, %c0_0] : memref<32x16xbf16, #tpu.memory_space<vmem>>, vector<32x16xbf16>
    %c0_1 = arith.constant 0 : index
    %c0_2 = arith.constant 0 : index
    %1 = vector.load %arg4[%c0_1, %c0_2] : memref<32x32xbf16, #tpu.memory_space<vmem>>, vector<32x32xbf16>
    %c0_3 = arith.constant 0 : index
    %c0_4 = arith.constant 0 : index
    %2 = vector.load %arg6[%c0_3, %c0_4] : memref<2x32xbf16, #tpu.memory_space<vmem>>, vector<2x32xbf16>
    %c0_5 = arith.constant 0 : index
    %c0_6 = arith.constant 0 : index
    %3 = vector.load %arg3[%c0_5, %c0_6] : memref<32x1xf32, #tpu.memory_space<vmem>>, vector<32x1xf32>
    %c0_7 = arith.constant 0 : index
    %c0_8 = arith.constant 0 : index
    %4 = vector.load %arg5[%c0_7, %c0_8] : memref<32x1xf32, #tpu.memory_space<vmem>>, vector<32x1xf32>
    %c0_9 = arith.constant 0 : index
    %c0_10 = arith.constant 0 : index
    %5 = vector.load %arg7[%c0_9, %c0_10] : memref<2x1xf32, #tpu.memory_space<vmem>>, vector<2x1xf32>
    %c0_i32 = arith.constant 0 : i32
    %c512_i32 = arith.constant 512 : i32
    %6 = arith.muli %c0_i32, %c512_i32 : i32
    %7 = tpu.assume_multiple %6, 512 : i32
    %c0_11 = arith.constant 0 : index
    %8 = arith.index_cast %7 : i32 to index
    %9 = vector.load %arg1[%c0_11, %8] : memref<16x512xbf16, #tpu.memory_space<vmem>>, vector<16x512xbf16>
    %cst = arith.constant dense<0.000000e+00> : vector<32x512xf32>
    %10 = tpu.matmul %0, %9, %cst {dimension_numbers = #tpu.dot_dimension_numbers<[1], [0], [0], [1], [0, 0, 1, 1], [], []>} : vector<32x16xbf16>, vector<16x512xbf16>, vector<32x512xf32> -> vector<32x512xf32>
    %11 = vector.broadcast %3 : vector<32x1xf32> to vector<32x512xf32>
    %12 = arith.addf %10, %11 : vector<32x512xf32>
    %cst_12 = arith.constant 0.000000e+00 : f32
    %13 = vector.broadcast %cst_12 : f32 to vector<32x512xf32>
    %14 = arith.maximumf %12, %13 : vector<32x512xf32>
    %15 = arith.truncf %14 : vector<32x512xf32> to vector<32x512xbf16>
    %cst_13 = arith.constant dense<0.000000e+00> : vector<32x512xf32>
    %16 = tpu.matmul %1, %15, %cst_13 {dimension_numbers = #tpu.dot_dimension_numbers<[1], [0], [0], [1], [0, 0, 1, 1], [], []>} : vector<32x32xbf16>, vector<32x512xbf16>, vector<32x512xf32> -> vector<32x512xf32>
    %17 = vector.broadcast %4 : vector<32x1xf32> to vector<32x512xf32>
    %18 = arith.addf %16, %17 : vector<32x512xf32>
    %cst_14 = arith.constant 0.000000e+00 : f32
    %19 = vector.broadcast %cst_14 : f32 to vector<32x512xf32>
    %20 = arith.maximumf %18, %19 : vector<32x512xf32>
    %21 = arith.truncf %20 : vector<32x512xf32> to vector<32x512xbf16>
    %cst_15 = arith.constant dense<0.000000e+00> : vector<2x512xf32>
    %22 = tpu.matmul %2, %21, %cst_15 {dimension_numbers = #tpu.dot_dimension_numbers<[1], [0], [0], [1], [0, 0, 1, 1], [], []>} : vector<2x32xbf16>, vector<32x512xbf16>, vector<2x512xf32> -> vector<2x512xf32>
    %23 = vector.broadcast %5 : vector<2x1xf32> to vector<2x512xf32>
    %24 = arith.addf %22, %23 : vector<2x512xf32>
    %c0_16 = arith.constant 0 : index
    %25 = arith.index_cast %7 : i32 to index
    %26 = vector.load %arg8[%c0_16, %25] : memref<2x512xf32, #tpu.memory_space<vmem>>, vector<2x512xf32>
    tpu.vector_store %arg8[%c0_16, %25], %24 {strides = array<i32>} : memref<2x512xf32, #tpu.memory_space<vmem>>, vector<2x512xf32>,
    %c1_i32 = arith.constant 1 : i32
    return
  }
  func.func @transform_0(%arg0: i32) -> (i32, i32) {
    %c0_i32 = arith.constant 0 : i32
    %c0_i32_0 = arith.constant 0 : i32
    return %c0_i32, %arg0 : i32, i32
  }
  func.func @transform_1(%arg0: i32) -> (i32, i32) {
    %c0_i32 = arith.constant 0 : i32
    %c0_i32_0 = arith.constant 0 : i32
    %c0_i32_1 = arith.constant 0 : i32
    return %c0_i32, %c0_i32_0 : i32, i32
  }
  func.func @transform_2(%arg0: i32) -> (i32, i32) {
    %c0_i32 = arith.constant 0 : i32
    %c0_i32_0 = arith.constant 0 : i32
    %c0_i32_1 = arith.constant 0 : i32
    return %c0_i32, %c0_i32_0 : i32, i32
  }
  func.func @transform_3(%arg0: i32) -> (i32, i32) {
    %c0_i32 = arith.constant 0 : i32
    %c0_i32_0 = arith.constant 0 : i32
    %c0_i32_1 = arith.constant 0 : i32
    return %c0_i32, %c0_i32_0 : i32, i32
  }
  func.func @transform_4(%arg0: i32) -> (i32, i32) {
    %c0_i32 = arith.constant 0 : i32
    %c0_i32_0 = arith.constant 0 : i32
    %c0_i32_1 = arith.constant 0 : i32
    return %c0_i32, %c0_i32_0 : i32, i32
  }
  func.func @transform_5(%arg0: i32) -> (i32, i32) {
    %c0_i32 = arith.constant 0 : i32
    %c0_i32_0 = arith.constant 0 : i32
    %c0_i32_1 = arith.constant 0 : i32
    return %c0_i32, %c0_i32_0 : i32, i32
  }
  func.func @transform_6(%arg0: i32) -> (i32, i32) {
    %c0_i32 = arith.constant 0 : i32
    %c0_i32_0 = arith.constant 0 : i32
    %c0_i32_1 = arith.constant 0 : i32
    return %c0_i32, %c0_i32_0 : i32, i32
  }
  func.func @transform_7(%arg0: i32) -> (i32, i32) {
    %c0_i32 = arith.constant 0 : i32
    %c0_i32_0 = arith.constant 0 : i32
    return %c0_i32, %arg0 : i32, i32
  }
}

</mosaic_0001>

<llo_original>
// kernel: mlp_forward.1
$region0: #{mlp_forward.1}
  #allocation0 [shape = 'u32[]', space=smem, size = 0x4, offset = 0x4, fixed_abs, tag = 'smem constant byte address 0x4 - core index']
  #allocation1 [shape = 'u32[144,128]{1,0:T(1,128)}', space=vmem, size = 0x12000, scoped, tag = 'internal scratch']
  %s0 = inlined_call_operand.vmem [shape: bf16[16,1024], index: 0, kind: input, shape index: {}]
  %s1 = inlined_call_operand.vmem [shape: bf16[32,16], index: 1, kind: input, shape index: {}]
  %s2 = inlined_call_operand.vmem [shape: f32[32,1], index: 2, kind: input, shape index: {}]
  %s3 = inlined_call_operand.vmem [shape: bf16[32,32], index: 3, kind: input, shape index: {}]
  %s4 = inlined_call_operand.vmem [shape: f32[32,1], index: 4, kind: input, shape index: {}]
  %s5 = inlined_call_operand.vmem [shape: bf16[2,32], index: 5, kind: input, shape index: {}]
  %s6 = inlined_call_operand.vmem [shape: f32[2,1], index: 6, kind: input, shape index: {}]
  %s7 = inlined_call_operand.hbm [shape: f32[2,1024], index: 7, kind: output, shape index: {}]
  %s8 = sld [smem:[#allocation0]]
  $region84: #{mlp_forward.1} parent=0
    _
  %s10 = ssub.s32 1, %s8
  %s11 = scalar_select 0, %s10, %s8
  $region1: #{mlp_forward.1} parent=0
    #allocation2 [shape = 'u8[32768]{0}', space=vmem, size = 0x8000, scoped, tag = 'input window, operand 0']
    #allocation3 [shape = 'u8[8192]{0}', space=vmem, size = 0x2000, scoped, tag = 'output window, operand 0']
    #allocation4 [shape = 's32[2]{0}', space=sflag, size = 0x8, scoped, tag = 'scoped memory for mlp_forward.1']
    %12 = vsyncpa [#allocation4], 0
    %s13 = scalar_lea.sflag [#allocation4], 1
    %14 = vsyncpa %s13, 0
    loop: start=0, step=1, limit=4
    $region2: #{mlp_forward.1} parent=1 // loop_pre_header
      _
    $region3: #{mlp_forward.1} parent=1 // loop_header
      %s16 = sphi 0, %s20
      %p17 = scmp.ge.s32.totalorder %s16, 4
      %s26 = sphi 0, %s28
      %s29 = sphi 0, %s26
      %s30 = sphi 0, %s29
      %s46 = sphi 0, %s30
      %s50 = sphi 0, %s50
      %s52 = sphi 0, %s50
      %s53 = sphi 0, %s52
      %s67 = sphi 0, %s53
      %s71 = sphi 0, %s71
      %s73 = sphi 0, %s71
      %s74 = sphi 0, %s73
      %s88 = sphi 0, %s74
      %s92 = sphi 0, %s92
      %s94 = sphi 0, %s92
      %s95 = sphi 0, %s94
      %s109 = sphi 0, %s95
      %s113 = sphi 0, %s113
      %s115 = sphi 0, %s113
      %s116 = sphi 0, %s115
      %s130 = sphi 0, %s116
      %s134 = sphi 0, %s134
      %s136 = sphi 0, %s134
      %s137 = sphi 0, %s136
      %s151 = sphi 0, %s137
      %s155 = sphi 0, %s155
      %s157 = sphi 0, %s155
      %s158 = sphi 0, %s157
      %s172 = sphi 0, %s158
      %s178 = sphi 0, %s180
      %s181 = sphi 0, %s178
      %s182 = sphi 0, %s181
      %s198 = sphi 0, %s182
    $region4: #{mlp_forward.1} parent=1 // loop_header_branch
      %19 = sbr.rel (%p17) target = $region8
    $region5: #{mlp_forward.1} parent=1 // loop_body
      %s21 = ssub.s32 %s16, 1
      %s22 = ssub.s32 %s16, 2
      %s23 = sadd.s32 %s16, 1
      %s24 = ssub.s32 %s16, %s23
      %p25 = scmp.eq.s32.totalorder %s24, 0
      %s27 = sadd.s32 %s26, 1
      %s28 = scalar_select %p25, %s26, %s27
      %p31 = pneg %p25
      %p32 = scmp.eq.s32.totalorder %s16, 1
      %p33 = por %p31, %p32
      %p34 = scmp.ne.s32.totalorder %s26, %s29
      %p35 = scmp.eq.s32.totalorder %s16, 0
      %p36 = por %p34, %p35
      %p37 = scmp.ne.s32.totalorder %s26, %s29
      %p38 = scmp.eq.s32.totalorder %s21, 1
      %p39 = por %p37, %p38
      %p40 = scmp.ne.s32.totalorder %s29, %s30
      %p41 = scmp.eq.s32.totalorder %s21, 0
      %p42 = por %p40, %p41
      %p43 = scmp.ne.s32.totalorder %s29, %s30
      %p44 = scmp.eq.s32.totalorder %s22, 1
      %p45 = por %p43, %p44
      %p47 = scmp.ne.s32.totalorder %s30, %s46
      %p48 = scmp.eq.s32.totalorder %s22, 0
      %p49 = por %p47, %p48
      %s51 = sadd.s32 %s50, 1
      %p54 = scmp.eq.s32.totalorder %s16, 1
      %p55 = scmp.ne.s32.totalorder %s50, %s52
      %p56 = scmp.eq.s32.totalorder %s16, 0
      %p57 = por %p55, %p56
      %p58 = scmp.ne.s32.totalorder %s50, %s52
      %p59 = scmp.eq.s32.totalorder %s21, 1
      %p60 = por %p58, %p59
      %p61 = scmp.ne.s32.totalorder %s52, %s53
      %p62 = scmp.eq.s32.totalorder %s21, 0
      %p63 = por %p61, %p62
      %p64 = scmp.ne.s32.totalorder %s52, %s53
      %p65 = scmp.eq.s32.totalorder %s22, 1
      %p66 = por %p64, %p65
      %p68 = scmp.ne.s32.totalorder %s53, %s67
      %p69 = scmp.eq.s32.totalorder %s22, 0
      %p70 = por %p68, %p69
      %s72 = sadd.s32 %s71, 1
      %p75 = scmp.eq.s32.totalorder %s16, 1
      %p76 = scmp.ne.s32.totalorder %s71, %s73
      %p77 = scmp.eq.s32.totalorder %s16, 0
      %p78 = por %p76, %p77
      %p79 = scmp.ne.s32.totalorder %s71, %s73
      %p80 = scmp.eq.s32.totalorder %s21, 1
      %p81 = por %p79, %p80
      %p82 = scmp.ne.s32.totalorder %s73, %s74
      %p83 = scmp.eq.s32.totalorder %s21, 0
      %p84 = por %p82, %p83
      %p85 = scmp.ne.s32.totalorder %s73, %s74
      %p86 = scmp.eq.s32.totalorder %s22, 1
      %p87 = por %p85, %p86
      %p89 = scmp.ne.s32.totalorder %s74, %s88
      %p90 = scmp.eq.s32.totalorder %s22, 0
      %p91 = por %p89, %p90
      %s93 = sadd.s32 %s92, 1
      %p96 = scmp.eq.s32.totalorder %s16, 1
      %p97 = scmp.ne.s32.totalorder %s92, %s94
      %p98 = scmp.eq.s32.totalorder %s16, 0
      %p99 = por %p97, %p98
      %p100 = scmp.ne.s32.totalorder %s92, %s94
      %p101 = scmp.eq.s32.totalorder %s21, 1
      %p102 = por %p100, %p101
      %p103 = scmp.ne.s32.totalorder %s94, %s95
      %p104 = scmp.eq.s32.totalorder %s21, 0
      %p105 = por %p103, %p104
      %p106 = scmp.ne.s32.totalorder %s94, %s95
      %p107 = scmp.eq.s32.totalorder %s22, 1
      %p108 = por %p106, %p107
      %p110 = scmp.ne.s32.totalorder %s95, %s109
      %p111 = scmp.eq.s32.totalorder %s22, 0
      %p112 = por %p110, %p111
      %s114 = sadd.s32 %s113, 1
      %p117 = scmp.eq.s32.totalorder %s16, 1
      %p118 = scmp.ne.s32.totalorder %s113, %s115
      %p119 = scmp.eq.s32.totalorder %s16, 0
      %p120 = por %p118, %p119
      %p121 = scmp.ne.s32.totalorder %s113, %s115
      %p122 = scmp.eq.s32.totalorder %s21, 1
      %p123 = por %p121, %p122
      %p124 = scmp.ne.s32.totalorder %s115, %s116
      %p125 = scmp.eq.s32.totalorder %s21, 0
      %p126 = por %p124, %p125
      %p127 = scmp.ne.s32.totalorder %s115, %s116
      %p128 = scmp.eq.s32.totalorder %s22, 1
      %p129 = por %p127, %p128
      %p131 = scmp.ne.s32.totalorder %s116, %s130
      %p132 = scmp.eq.s32.totalorder %s22, 0
      %p133 = por %p131, %p132
      %s135 = sadd.s32 %s134, 1
      %p138 = scmp.eq.s32.totalorder %s16, 1
      %p139 = scmp.ne.s32.totalorder %s134, %s136
      %p140 = scmp.eq.s32.totalorder %s16, 0
      %p141 = por %p139, %p140
      %p142 = scmp.ne.s32.totalorder %s134, %s136
      %p143 = scmp.eq.s32.totalorder %s21, 1
      %p144 = por %p142, %p143
      %p145 = scmp.ne.s32.totalorder %s136, %s137
      %p146 = scmp.eq.s32.totalorder %s21, 0
      %p147 = por %p145, %p146
      %p148 = scmp.ne.s32.totalorder %s136, %s137
      %p149 = scmp.eq.s32.totalorder %s22, 1
      %p150 = por %p148, %p149
      %p152 = scmp.ne.s32.totalorder %s137, %s151
      %p153 = scmp.eq.s32.totalorder %s22, 0
      %p154 = por %p152, %p153
      %s156 = sadd.s32 %s155, 1
      %p159 = scmp.eq.s32.totalorder %s16, 1
      %p160 = scmp.ne.s32.totalorder %s155, %s157
      %p161 = scmp.eq.s32.totalorder %s16, 0
      %p162 = por %p160, %p161
      %p163 = scmp.ne.s32.totalorder %s155, %s157
      %p164 = scmp.eq.s32.totalorder %s21, 1
      %p165 = por %p163, %p164
      %p166 = scmp.ne.s32.totalorder %s157, %s158
      %p167 = scmp.eq.s32.totalorder %s21, 0
      %p168 = por %p166, %p167
      %p169 = scmp.ne.s32.totalorder %s157, %s158
      %p170 = scmp.eq.s32.totalorder %s22, 1
      %p171 = por %p169, %p170
      %p173 = scmp.ne.s32.totalorder %s158, %s172
      %p174 = scmp.eq.s32.totalorder %s22, 0
      %p175 = por %p173, %p174
      %s176 = ssub.s32 %s16, %s23
      %p177 = scmp.eq.s32.totalorder %s176, 0
      %s179 = sadd.s32 %s178, 1
      %s180 = scalar_select %p177, %s178, %s179
      %p183 = pneg %p177
      %p184 = scmp.eq.s32.totalorder %s16, 1
      %p185 = por %p183, %p184
      %p186 = scmp.ne.s32.totalorder %s178, %s181
      %p187 = scmp.eq.s32.totalorder %s16, 0
      %p188 = por %p186, %p187
      %p189 = scmp.ne.s32.totalorder %s178, %s181
      %p190 = scmp.eq.s32.totalorder %s21, 1
      %p191 = por %p189, %p190
      %p192 = scmp.ne.s32.totalorder %s181, %s182
      %p193 = scmp.eq.s32.totalorder %s21, 0
      %p194 = por %p192, %p193
      %p195 = scmp.ne.s32.totalorder %s181, %s182
      %p196 = scmp.eq.s32.totalorder %s22, 1
      %p197 = por %p195, %p196
      %p199 = scmp.ne.s32.totalorder %s182, %s198
      %p200 = scmp.eq.s32.totalorder %s22, 0
      %p201 = por %p199, %p200
      %p202 = scmp.le.s32.totalorder 1, %s16
      %p203 = scmp.lt.s32.totalorder %s16, 3
      %p204 = pnand %p202, %p203
      %p205 = pneg %p204
      // Predicated region
      $region9: #{mlp_forward.1} parent=5 // pred_check
        _
      $region10: #{mlp_forward.1} parent=5 // pred_check_branch
        %207 = sbr.rel (%p204) target = $region12
      $region11: #{mlp_forward.1} parent=5 // pred_region
        %s208 = ssub.s32 %s16, 1
        // Predicated region
        $region13: #{mlp_forward.1} parent=11 // pred_check
          %p209 = pneg %p63
        $region14: #{mlp_forward.1} parent=11 // pred_check_branch
          %211 = sbr.rel (%p209) target = $region16
        $region15: #{mlp_forward.1} parent=11 // pred_region
          _
        $region16: #{mlp_forward.1} parent=11 // pred_fallthru
          _
        // Predicated region
        $region17: #{mlp_forward.1} parent=11 // pred_check
          %p212 = pneg %p84
        $region18: #{mlp_forward.1} parent=11 // pred_check_branch
          %214 = sbr.rel (%p212) target = $region20
        $region19: #{mlp_forward.1} parent=11 // pred_region
          _
        $region20: #{mlp_forward.1} parent=11 // pred_fallthru
          _
        // Predicated region
        $region21: #{mlp_forward.1} parent=11 // pred_check
          %p215 = pneg %p105
        $region22: #{mlp_forward.1} parent=11 // pred_check_branch
          %217 = sbr.rel (%p215) target = $region24
        $region23: #{mlp_forward.1} parent=11 // pred_region
          _
        $region24: #{mlp_forward.1} parent=11 // pred_fallthru
          _
        // Predicated region
        $region25: #{mlp_forward.1} parent=11 // pred_check
          %p218 = pneg %p126
        $region26: #{mlp_forward.1} parent=11 // pred_check_branch
          %220 = sbr.rel (%p218) target = $region28
        $region27: #{mlp_forward.1} parent=11 // pred_region
          _
        $region28: #{mlp_forward.1} parent=11 // pred_fallthru
          _
        // Predicated region
        $region29: #{mlp_forward.1} parent=11 // pred_check
          %p221 = pneg %p147
        $region30: #{mlp_forward.1} parent=11 // pred_check_branch
          %223 = sbr.rel (%p221) target = $region32
        $region31: #{mlp_forward.1} parent=11 // pred_region
          _
        $region32: #{mlp_forward.1} parent=11 // pred_fallthru
          _
        // Predicated region
        $region33: #{mlp_forward.1} parent=11 // pred_check
          %p224 = pneg %p168
        $region34: #{mlp_forward.1} parent=11 // pred_check_branch
          %226 = sbr.rel (%p224) target = $region36
        $region35: #{mlp_forward.1} parent=11 // pred_region
          _
        $region36: #{mlp_forward.1} parent=11 // pred_fallthru
          _
      $region12: #{mlp_forward.1} parent=5 // pred_fallthru
        _
      %p227 = scmp.lt.s32.totalorder %s16, 2
      // Predicated region
      $region37: #{mlp_forward.1} parent=5 // pred_check
        %p228 = pneg %p227
      $region38: #{mlp_forward.1} parent=5 // pred_check_branch
        %230 = sbr.rel (%p228) target = $region40
      $region39: #{mlp_forward.1} parent=5 // pred_region
        // Predicated region
        $region41: #{mlp_forward.1} parent=39 // pred_check
          %p231 = pneg %p36
        $region42: #{mlp_forward.1} parent=39 // pred_check_branch
          %233 = sbr.rel (%p231) target = $region44
        $region43: #{mlp_forward.1} parent=39 // pred_region
          %s234 = sand.u32 %s26, 1
          %s235 = sand.u32 %s26, 1
          %s236 = smul.addr %s235, 32
          %s237 = scalar_lea.vmem [#allocation2], %s236
          %s238 = smul.u32 4, %s16
          %s239 = smul.addr %s238, 4
          %s240 = scalar_lea.vmem %s0, %s239
          // Predicated region
          $region45: #{mlp_forward.1} parent=43 // pred_check
            _
          $region46: #{mlp_forward.1} parent=43 // pred_check_branch
            %242 = sbr.rel (0) target = $region48
          $region47: #{mlp_forward.1} parent=43 // pred_region
            // Predicated region
            $region49: #{mlp_forward.1} parent=47 // pred_check
              _
            $region50: #{mlp_forward.1} parent=47 // pred_check_branch
              %244 = sbr.rel (0) target = $region52
            $region51: #{mlp_forward.1} parent=47 // pred_region
              loop: start=0, step=1, limit=1
              $region53: #{mlp_forward.1} parent=51 // loop_pre_header
                _
              $region54: #{mlp_forward.1} parent=51 // loop_header
                %s246 = sphi 0, %s250
                %p247 = scmp.ge.s32.totalorder %s246, 1
                %s251 = sphi %s240, %s240
                %s252 = sphi %s237, %s237
              $region55: #{mlp_forward.1} parent=51 // loop_header_branch
                %249 = sbr.rel (%p247) target = $region59
              $region56: #{mlp_forward.1} parent=51 // loop_body
                %v253 = vld [vmem:[%s251] sm:$0xff]
                %254 = vst [vmem:[%s252] sm:$0xff] %v253
                %v255 = vld [vmem:[%s251 + $0x8] sm:$0xff]
                %256 = vst [vmem:[%s252 + $0x8] sm:$0xff] %v255
                %v257 = vld [vmem:[%s251 + $0x20] sm:$0xff]
                %258 = vst [vmem:[%s252 + $0x10] sm:$0xff] %v257
                %v259 = vld [vmem:[%s251 + $0x28] sm:$0xff]
                %260 = vst [vmem:[%s252 + $0x18] sm:$0xff] %v259
              $region57: #{mlp_forward.1} parent=51 // loop_footer
                %s250 = sadd.s32 1, %s246
              $region58: #{mlp_forward.1} parent=51 // loop_footer_branch
                %245 = sbr.rel target = $region54
              $region59: #{mlp_forward.1} parent=51 // loop_exit
                _
            $region52: #{mlp_forward.1} parent=47 // pred_fallthru
              _
            // Predicated region
            $region60: #{mlp_forward.1} parent=47 // pred_check
              _
            $region61: #{mlp_forward.1} parent=47 // pred_check_branch
              %262 = sbr.rel target = $region63
            $region62: #{mlp_forward.1} parent=47 // pred_region
              _
            $region63: #{mlp_forward.1} parent=47 // pred_fallthru
              _
          $region48: #{mlp_forward.1} parent=43 // pred_fallthru
            _
          %263 = vnop
        $region44: #{mlp_forward.1} parent=39 // pred_fallthru
          _
      $region40: #{mlp_forward.1} parent=5 // pred_fallthru
        _
      %p264 = scmp.le.s32.totalorder 1, %s16
      %p265 = scmp.lt.s32.totalorder %s16, 3
      %p266 = pnand %p264, %p265
      %p267 = pneg %p266
      // Predicated region
      $region64: #{mlp_forward.1} parent=5 // pred_check
        _
      $region65: #{mlp_forward.1} parent=5 // pred_check_branch
        %269 = sbr.rel (%p266) target = $region67
      $region66: #{mlp_forward.1} parent=5 // pred_region
        %s270 = ssub.s32 %s16, 1
        %s271 = sand.u32 %s29, 1
        %s272 = sand.u32 %s29, 1
        %s273 = smul.addr %s272, 32
        %s274 = scalar_lea.vmem [#allocation2], %s273
        // Predicated region
        $region68: #{mlp_forward.1} parent=66 // pred_check
          %p275 = pneg %p42
        $region69: #{mlp_forward.1} parent=66 // pred_check_branch
          %277 = sbr.rel (%p275) target = $region71
        $region70: #{mlp_forward.1} parent=66 // pred_region
          _
        $region71: #{mlp_forward.1} parent=66 // pred_fallthru
          _
        %s278 = sand.u32 %s29, 1
        %s279 = sand.u32 %s29, 1
        %s280 = smul.addr %s279, 32
        %s281 = scalar_lea.vmem [#allocation2], %s280
        %p282 = pneg %p42
        %p283 = pneg %p39
        %p284 = pneg %p63
        %p285 = pneg %p60
        %p286 = pneg %p84
        %p287 = pneg %p81
        %p288 = pneg %p105
        %p289 = pneg %p102
        %p290 = pneg %p126
        %p291 = pneg %p123
        %p292 = pneg %p147
        %p293 = pneg %p144
        %p294 = pneg %p168
        %p295 = pneg %p165
        %p296 = pneg %p194
        %p297 = pneg %p191
        %s298 = sand.u32 %s181, 1
        %s299 = scalar_lea.sflag [#allocation4], %s298
        %s300 = sand.u32 %s181, 1
        %s301 = smul.addr %s300, 8
        %s302 = scalar_lea.vmem [#allocation3], %s301
        %s303 = smul.u32 4, %s21
        %s304 = smul.u32 4, %s21
        %v306 = vld [vmem:[%s1] sm:$0xf]
        %v307 = vld [vmem:[%s1 + $0x4] sm:$0xf]
        %v308 = vld [vmem:[%s1 + $0x8] sm:$0xf]
        %v309 = vld [vmem:[%s1 + $0xc] sm:$0xf]
        %v310 = vld [vmem:[%s3] sm:$0xf]
        %v311 = vld [vmem:[%s3 + $0x4] sm:$0xf]
        %v312 = vld [vmem:[%s3 + $0x8] sm:$0xf]
        %v313 = vld [vmem:[%s3 + $0xc] sm:$0xf]
        %v314 = vld [vmem:[%s5] sm:$0x1]
        %v315 = vld [vmem:[%s2] sm:$0xff]
        %v316 = vld [vmem:[%s2 + $0x8] sm:$0xff]
        %v317 = vld [vmem:[%s2 + $0x10] sm:$0xff]
        %v318 = vld [vmem:[%s2 + $0x18] sm:$0xff]
        %v319 = vld [vmem:[%s4] sm:$0xff]
        %v320 = vld [vmem:[%s4 + $0x8] sm:$0xff]
        %v321 = vld [vmem:[%s4 + $0x10] sm:$0xff]
        %v322 = vld [vmem:[%s4 + $0x18] sm:$0xff]
        %v323 = vld [vmem:[%s6] sm:$0x3]
        %v324 = vld [vmem:[%s274] sm:$0xff]
        %v325 = vld [vmem:[%s274 + $0x8] sm:$0xff]
        %v326 = vld [vmem:[%s274 + $0x10] sm:$0xff]
        %v327 = vld [vmem:[%s274 + $0x18] sm:$0xff]
        %329 = vset.pattern.permute.xlu0 0
        %330 = vperm.xlu0 %329, %v315
        %v331 = vpop.permute.xlu0 %330
        %334 = vset.pattern.permute.xlu0 0
        %335 = vperm.xlu0 %334, %v316
        %v336 = vpop.permute.xlu0 %335
        %339 = vset.pattern.permute.xlu0 0
        %340 = vperm.xlu0 %339, %v317
        %v341 = vpop.permute.xlu0 %340
        %344 = vset.pattern.permute.xlu0 0
        %345 = vperm.xlu0 %344, %v318
        %v346 = vpop.permute.xlu0 %345
        %v352 = vunpack.c.l.b16 %v306
        %v353 = vunpack.c.l.b16 %v307
        %v354 = vunpack.c.l.b16 %v308
        %v355 = vunpack.c.l.b16 %v309
        %v356 = vpack.c.b16 %v353, %v352
        %v357 = vpack.c.b16 %v355, %v354
        %v362 = vunpack.c.l.b16 %v324
        %v363 = vunpack.c.h.b16 %v324
        %v364 = vunpack.c.l.b16 %v325
        %v365 = vunpack.c.h.b16 %v325
        %v366 = vunpack.c.l.b16 %v326
        %v367 = vunpack.c.h.b16 %v326
        %v368 = vunpack.c.l.b16 %v327
        %v369 = vunpack.c.h.b16 %v327
        %v370 = vpack.c.b16 %v366, %v362
        %v371 = vpack.c.b16 %v367, %v363
        %v372 = vpack.c.b16 %v368, %v364
        %v373 = vpack.c.b16 %v369, %v365
        %vm378 = vcmask 130048
        %v380 = vsel %vm378, %v356, 0
        %v383 = vsel %vm378, %v357, 0
        %385 = vmatprep.subr.bf16.mxu0 0
        %386 = vmatpush1.bf16.msra.mxu0 0
        %387 = vmatprep.subr.bf16.mxu0 0
        %388 = vmatpush1.bf16.msra.mxu0 0
        %389 = vmatprep.subr.bf16.mxu0 0
        %390 = vmatpush1.bf16.msra.mxu0 0
        %391 = vmatprep.subr.bf16.mxu0 0
        %392 = vmatpush1.bf16.msra.mxu0 0
        %393 = vmatprep.subr.bf16.mxu0 0
        %394 = vmatpush1.bf16.msra.mxu0 0
        %395 = vmatprep.subr.bf16.mxu0 0
        %396 = vmatpush1.bf16.msra.mxu0 0
        %397 = vmatprep.subr.bf16.mxu0 0
        %398 = vmatpush1.bf16.msra.mxu0 0
        %399 = vmatprep.subr.bf16.mxu0 %v371
        %400 = vmatpush1.bf16.msra.mxu0 %v370
        %401 = vmatprep.subr.bf16.mxu0 0
        %402 = vmatpush2.bf16.msra.mxu0 0
        %403 = vmatprep.subr.bf16.mxu0 0
        %404 = vmatpush2.bf16.msra.mxu0 0
        %405 = vmatprep.subr.bf16.mxu0 0
        %406 = vmatpush2.bf16.msra.mxu0 0
        %407 = vmatprep.subr.bf16.mxu0 0
        %408 = vmatpush2.bf16.msra.mxu0 0
        %409 = vmatprep.subr.bf16.mxu0 0
        %410 = vmatpush2.bf16.msra.mxu0 0
        %411 = vmatprep.subr.bf16.mxu0 0
        %412 = vmatpush2.bf16.msra.mxu0 0
        %413 = vmatprep.subr.bf16.mxu0 0
        %414 = vmatpush2.bf16.msra.mxu0 0
        %415 = vmatprep.subr.bf16.mxu0 0
        %416 = vmatpush2.bf16.msra.mxu0 0
        %417 = vmatprep.mubr.bf16.mxu0 0
        %418 = vmatmul.mubr.bf16.gmra.mxu0 %v380
        %v419 = vpop.f32.mrf.mxu0
        %v420 = vadd.f32 %v331, %v419
        %v421 = vpop.f32.mrf.mxu0
        %v422 = vadd.f32 %v331, %v421
        %v423 = vpop.f32.mrf.mxu0
        %v424 = vadd.f32 %v336, %v423
        %v425 = vpop.f32.mrf.mxu0
        %v426 = vadd.f32 %v336, %v425
        %427 = vmatprep.mubr.bf16.mxu0 0
        %428 = vmatmul.mubr.bf16.gmra.mxu0 %v383
        %v429 = vpop.f32.mrf.mxu0
        %v430 = vadd.f32 %v341, %v429
        %v431 = vpop.f32.mrf.mxu0
        %v432 = vadd.f32 %v341, %v431
        %v433 = vpop.f32.mrf.mxu0
        %v434 = vadd.f32 %v346, %v433
        %v435 = vpop.f32.mrf.mxu0
        %v436 = vadd.f32 %v346, %v435
        %437 = vdwg.mxu0
        %438 = vmatprep.subr.bf16.mxu0 0
        %439 = vmatpush1.bf16.msra.mxu0 0
        %440 = vmatprep.subr.bf16.mxu0 0
        %441 = vmatpush1.bf16.msra.mxu0 0
        %442 = vmatprep.subr.bf16.mxu0 0
        %443 = vmatpush1.bf16.msra.mxu0 0
        %444 = vmatprep.subr.bf16.mxu0 0
        %445 = vmatpush1.bf16.msra.mxu0 0
        %446 = vmatprep.subr.bf16.mxu0 0
        %447 = vmatpush1.bf16.msra.mxu0 0
        %448 = vmatprep.subr.bf16.mxu0 0
        %449 = vmatpush1.bf16.msra.mxu0 0
        %450 = vmatprep.subr.bf16.mxu0 0
        %451 = vmatpush1.bf16.msra.mxu0 0
        %452 = vmatprep.subr.bf16.mxu0 %v373
        %453 = vmatpush1.bf16.msra.mxu0 %v372
        %454 = vmatprep.subr.bf16.mxu0 0
        %455 = vmatpush2.bf16.msra.mxu0 0
        %456 = vmatprep.subr.bf16.mxu0 0
        %457 = vmatpush2.bf16.msra.mxu0 0
        %458 = vmatprep.subr.bf16.mxu0 0
        %459 = vmatpush2.bf16.msra.mxu0 0
        %460 = vmatprep.subr.bf16.mxu0 0
        %461 = vmatpush2.bf16.msra.mxu0 0
        %462 = vmatprep.subr.bf16.mxu0 0
        %463 = vmatpush2.bf16.msra.mxu0 0
        %464 = vmatprep.subr.bf16.mxu0 0
        %465 = vmatpush2.bf16.msra.mxu0 0
        %466 = vmatprep.subr.bf16.mxu0 0
        %467 = vmatpush2.bf16.msra.mxu0 0
        %468 = vmatprep.subr.bf16.mxu0 0
        %469 = vmatpush2.bf16.msra.mxu0 0
        %470 = vmatprep.mubr.bf16.mxu0 0
        %471 = vmatmul.mubr.bf16.gmra.mxu0 %v380
        %v472 = vpop.f32.mrf.mxu0
        %v473 = vadd.f32 %v331, %v472
        %v474 = vpop.f32.mrf.mxu0
        %v475 = vadd.f32 %v331, %v474
        %v476 = vpop.f32.mrf.mxu0
        %v477 = vadd.f32 %v336, %v476
        %v478 = vpop.f32.mrf.mxu0
        %v479 = vadd.f32 %v336, %v478
        %480 = vmatprep.mubr.bf16.mxu0 0
        %481 = vmatmul.mubr.bf16.gmra.mxu0 %v383
        %v482 = vpop.f32.mrf.mxu0
        %v483 = vadd.f32 %v341, %v482
        %v484 = vpop.f32.mrf.mxu0
        %v485 = vadd.f32 %v341, %v484
        %v486 = vpop.f32.mrf.mxu0
        %v487 = vadd.f32 %v346, %v486
        %v488 = vpop.f32.mrf.mxu0
        %v489 = vadd.f32 %v346, %v488
        %490 = vdwg.mxu0
        %v491 = vmax.f32 %v420, 0.0
        %v492 = vmax.f32 %v422, 0.0
        %v493 = vmax.f32 %v473, 0.0
        %v494 = vmax.f32 %v475, 0.0
        %v495 = vmax.f32 %v424, 0.0
        %v496 = vmax.f32 %v426, 0.0
        %v497 = vmax.f32 %v477, 0.0
        %v498 = vmax.f32 %v479, 0.0
        %v499 = vmax.f32 %v430, 0.0
        %v500 = vmax.f32 %v432, 0.0
        %v501 = vmax.f32 %v483, 0.0
        %v502 = vmax.f32 %v485, 0.0
        %v503 = vmax.f32 %v434, 0.0
        %v504 = vmax.f32 %v436, 0.0
        %v505 = vmax.f32 %v487, 0.0
        %v506 = vmax.f32 %v489, 0.0
        %v507 = vpack.c.bf16 %v495, %v491
        %v508 = vpack.c.bf16 %v496, %v492
        %v509 = vpack.c.bf16 %v497, %v493
        %v510 = vpack.c.bf16 %v498, %v494
        %v511 = vpack.c.bf16 %v503, %v499
        %v512 = vpack.c.bf16 %v504, %v500
        %v513 = vpack.c.bf16 %v505, %v501
        %v514 = vpack.c.bf16 %v506, %v502
        %516 = vset.pattern.permute.xlu0 0
        %517 = vperm.xlu0 %516, %v319
        %v518 = vpop.permute.xlu0 %517
        %521 = vset.pattern.permute.xlu0 0
        %522 = vperm.xlu0 %521, %v320
        %v523 = vpop.permute.xlu0 %522
        %526 = vset.pattern.permute.xlu0 0
        %527 = vperm.xlu0 %526, %v321
        %v528 = vpop.permute.xlu0 %527
        %531 = vset.pattern.permute.xlu0 0
        %532 = vperm.xlu0 %531, %v322
        %v533 = vpop.permute.xlu0 %532
        %v539 = vunpack.c.l.b16 %v310
        %v540 = vunpack.c.l.b16 %v311
        %v541 = vunpack.c.l.b16 %v312
        %v542 = vunpack.c.l.b16 %v313
        %v543 = vpack.c.b16 %v540, %v539
        %v544 = vpack.c.b16 %v542, %v541
        %vm545 = vcmask 261120
        %v547 = vsel %vm545, %v543, 0
        %v550 = vsel %vm545, %v544, 0
        %552 = vmatprep.subr.bf16.mxu0 0
        %553 = vmatpush1.bf16.msra.mxu0 0
        %554 = vmatprep.subr.bf16.mxu0 0
        %555 = vmatpush1.bf16.msra.mxu0 0
        %556 = vmatprep.subr.bf16.mxu0 0
        %557 = vmatpush1.bf16.msra.mxu0 0
        %558 = vmatprep.subr.bf16.mxu0 0
        %559 = vmatpush1.bf16.msra.mxu0 0
        %560 = vmatprep.subr.bf16.mxu0 0
        %561 = vmatpush1.bf16.msra.mxu0 0
        %562 = vmatprep.subr.bf16.mxu0 0
        %563 = vmatpush1.bf16.msra.mxu0 0
        %564 = vmatprep.subr.bf16.mxu0 %v512
        %565 = vmatpush1.bf16.msra.mxu0 %v511
        %566 = vmatprep.subr.bf16.mxu0 %v508
        %567 = vmatpush1.bf16.msra.mxu0 %v507
        %568 = vmatprep.subr.bf16.mxu0 0
        %569 = vmatpush2.bf16.msra.mxu0 0
        %570 = vmatprep.subr.bf16.mxu0 0
        %571 = vmatpush2.bf16.msra.mxu0 0
        %572 = vmatprep.subr.bf16.mxu0 0
        %573 = vmatpush2.bf16.msra.mxu0 0
        %574 = vmatprep.subr.bf16.mxu0 0
        %575 = vmatpush2.bf16.msra.mxu0 0
        %576 = vmatprep.subr.bf16.mxu0 0
        %577 = vmatpush2.bf16.msra.mxu0 0
        %578 = vmatprep.subr.bf16.mxu0 0
        %579 = vmatpush2.bf16.msra.mxu0 0
        %580 = vmatprep.subr.bf16.mxu0 0
        %581 = vmatpush2.bf16.msra.mxu0 0
        %582 = vmatprep.subr.bf16.mxu0 0
        %583 = vmatpush2.bf16.msra.mxu0 0
        %584 = vmatprep.mubr.bf16.mxu0 0
        %585 = vmatmul.mubr.bf16.gmra.mxu0 %v547
        %v586 = vpop.f32.mrf.mxu0
        %v587 = vadd.f32 %v518, %v586
        %v588 = vpop.f32.mrf.mxu0
        %v589 = vadd.f32 %v518, %v588
        %v590 = vpop.f32.mrf.mxu0
        %v591 = vadd.f32 %v523, %v590
        %v592 = vpop.f32.mrf.mxu0
        %v593 = vadd.f32 %v523, %v592
        %594 = vmatprep.mubr.bf16.mxu0 0
        %595 = vmatmul.mubr.bf16.gmra.mxu0 %v550
        %v596 = vpop.f32.mrf.mxu0
        %v597 = vadd.f32 %v528, %v596
        %v598 = vpop.f32.mrf.mxu0
        %v599 = vadd.f32 %v528, %v598
        %v600 = vpop.f32.mrf.mxu0
        %v601 = vadd.f32 %v533, %v600
        %v602 = vpop.f32.mrf.mxu0
        %v603 = vadd.f32 %v533, %v602
        %604 = vdwg.mxu0
        %605 = vmatprep.subr.bf16.mxu0 0
        %606 = vmatpush1.bf16.msra.mxu0 0
        %607 = vmatprep.subr.bf16.mxu0 0
        %608 = vmatpush1.bf16.msra.mxu0 0
        %609 = vmatprep.subr.bf16.mxu0 0
        %610 = vmatpush1.bf16.msra.mxu0 0
        %611 = vmatprep.subr.bf16.mxu0 0
        %612 = vmatpush1.bf16.msra.mxu0 0
        %613 = vmatprep.subr.bf16.mxu0 0
        %614 = vmatpush1.bf16.msra.mxu0 0
        %615 = vmatprep.subr.bf16.mxu0 0
        %616 = vmatpush1.bf16.msra.mxu0 0
        %617 = vmatprep.subr.bf16.mxu0 %v514
        %618 = vmatpush1.bf16.msra.mxu0 %v513
        %619 = vmatprep.subr.bf16.mxu0 %v510
        %620 = vmatpush1.bf16.msra.mxu0 %v509
        %621 = vmatprep.subr.bf16.mxu0 0
        %622 = vmatpush2.bf16.msra.mxu0 0
        %623 = vmatprep.subr.bf16.mxu0 0
        %624 = vmatpush2.bf16.msra.mxu0 0
        %625 = vmatprep.subr.bf16.mxu0 0
        %626 = vmatpush2.bf16.msra.mxu0 0
        %627 = vmatprep.subr.bf16.mxu0 0
        %628 = vmatpush2.bf16.msra.mxu0 0
        %629 = vmatprep.subr.bf16.mxu0 0
        %630 = vmatpush2.bf16.msra.mxu0 0
        %631 = vmatprep.subr.bf16.mxu0 0
        %632 = vmatpush2.bf16.msra.mxu0 0
        %633 = vmatprep.subr.bf16.mxu0 0
        %634 = vmatpush2.bf16.msra.mxu0 0
        %635 = vmatprep.subr.bf16.mxu0 0
        %636 = vmatpush2.bf16.msra.mxu0 0
        %637 = vmatprep.mubr.bf16.mxu0 0
        %638 = vmatmul.mubr.bf16.gmra.mxu0 %v547
        %v639 = vpop.f32.mrf.mxu0
        %v640 = vadd.f32 %v518, %v639
        %v641 = vpop.f32.mrf.mxu0
        %v642 = vadd.f32 %v518, %v641
        %v643 = vpop.f32.mrf.mxu0
        %v644 = vadd.f32 %v523, %v643
        %v645 = vpop.f32.mrf.mxu0
        %v646 = vadd.f32 %v523, %v645
        %647 = vmatprep.mubr.bf16.mxu0 0
        %648 = vmatmul.mubr.bf16.gmra.mxu0 %v550
        %v649 = vpop.f32.mrf.mxu0
        %v650 = vadd.f32 %v528, %v649
        %v651 = vpop.f32.mrf.mxu0
        %v652 = vadd.f32 %v528, %v651
        %v653 = vpop.f32.mrf.mxu0
        %v654 = vadd.f32 %v533, %v653
        %v655 = vpop.f32.mrf.mxu0
        %v656 = vadd.f32 %v533, %v655
        %657 = vdwg.mxu0
        %v658 = vmax.f32 %v587, 0.0
        %v659 = vmax.f32 %v589, 0.0
        %v660 = vmax.f32 %v640, 0.0
        %v661 = vmax.f32 %v642, 0.0
        %v662 = vmax.f32 %v591, 0.0
        %v663 = vmax.f32 %v593, 0.0
        %v664 = vmax.f32 %v644, 0.0
        %v665 = vmax.f32 %v646, 0.0
        %v666 = vmax.f32 %v597, 0.0
        %v667 = vmax.f32 %v599, 0.0
        %v668 = vmax.f32 %v650, 0.0
        %v669 = vmax.f32 %v652, 0.0
        %v670 = vmax.f32 %v601, 0.0
        %v671 = vmax.f32 %v603, 0.0
        %v672 = vmax.f32 %v654, 0.0
        %v673 = vmax.f32 %v656, 0.0
        %v674 = vpack.c.bf16 %v662, %v658
        %v675 = vpack.c.bf16 %v663, %v659
        %v676 = vpack.c.bf16 %v664, %v660
        %v677 = vpack.c.bf16 %v665, %v661
        %v678 = vpack.c.bf16 %v670, %v666
        %v679 = vpack.c.bf16 %v671, %v667
        %v680 = vpack.c.bf16 %v672, %v668
        %v681 = vpack.c.bf16 %v673, %v669
        %683 = vset.pattern.permute.xlu0 0
        %684 = vperm.xlu0 %683, %v323
        %v685 = vpop.permute.xlu0 %684
        %v688 = vsel %vm545, %v314, 0
        %690 = vmatprep.subr.bf16.mxu0 0
        %691 = vmatpush1.bf16.msra.mxu0 0
        %692 = vmatprep.subr.bf16.mxu0 0
        %693 = vmatpush1.bf16.msra.mxu0 0
        %694 = vmatprep.subr.bf16.mxu0 0
        %695 = vmatpush1.bf16.msra.mxu0 0
        %696 = vmatprep.subr.bf16.mxu0 0
        %697 = vmatpush1.bf16.msra.mxu0 0
        %698 = vmatprep.subr.bf16.mxu0 0
        %699 = vmatpush1.bf16.msra.mxu0 0
        %700 = vmatprep.subr.bf16.mxu0 0
        %701 = vmatpush1.bf16.msra.mxu0 0
        %702 = vmatprep.subr.bf16.mxu0 %v679
        %703 = vmatpush1.bf16.msra.mxu0 %v678
        %704 = vmatprep.subr.bf16.mxu0 %v675
        %705 = vmatpush1.bf16.msra.mxu0 %v674
        %706 = vmatprep.subr.bf16.mxu0 0
        %707 = vmatpush2.bf16.msra.mxu0 0
        %708 = vmatprep.subr.bf16.mxu0 0
        %709 = vmatpush2.bf16.msra.mxu0 0
        %710 = vmatprep.subr.bf16.mxu0 0
        %711 = vmatpush2.bf16.msra.mxu0 0
        %712 = vmatprep.subr.bf16.mxu0 0
        %713 = vmatpush2.bf16.msra.mxu0 0
        %714 = vmatprep.subr.bf16.mxu0 0
        %715 = vmatpush2.bf16.msra.mxu0 0
        %716 = vmatprep.subr.bf16.mxu0 0
        %717 = vmatpush2.bf16.msra.mxu0 0
        %718 = vmatprep.subr.bf16.mxu0 0
        %719 = vmatpush2.bf16.msra.mxu0 0
        %720 = vmatprep.subr.bf16.mxu0 0
        %721 = vmatpush2.bf16.msra.mxu0 0
        %722 = vmatprep.mubr.bf16.mxu0 0
        %723 = vmatmul.mubr.bf16.gmra.mxu0 %v688
        %v724 = vpop.f32.mrf.mxu0
        %v725 = vadd.f32 %v685, %v724
        %v726 = vpop.f32.mrf.mxu0
        %v727 = vadd.f32 %v685, %v726
        %v728 = vpop.f32.mrf.mxu0
        %v729 = vpop.f32.mrf.mxu0
        %730 = vdwg.mxu0
        %731 = vmatprep.subr.bf16.mxu0 0
        %732 = vmatpush1.bf16.msra.mxu0 0
        %733 = vmatprep.subr.bf16.mxu0 0
        %734 = vmatpush1.bf16.msra.mxu0 0
        %735 = vmatprep.subr.bf16.mxu0 0
        %736 = vmatpush1.bf16.msra.mxu0 0
        %737 = vmatprep.subr.bf16.mxu0 0
        %738 = vmatpush1.bf16.msra.mxu0 0
        %739 = vmatprep.subr.bf16.mxu0 0
        %740 = vmatpush1.bf16.msra.mxu0 0
        %741 = vmatprep.subr.bf16.mxu0 0
        %742 = vmatpush1.bf16.msra.mxu0 0
        %743 = vmatprep.subr.bf16.mxu0 %v681
        %744 = vmatpush1.bf16.msra.mxu0 %v680
        %745 = vmatprep.subr.bf16.mxu0 %v677
        %746 = vmatpush1.bf16.msra.mxu0 %v676
        %747 = vmatprep.subr.bf16.mxu0 0
        %748 = vmatpush2.bf16.msra.mxu0 0
        %749 = vmatprep.subr.bf16.mxu0 0
        %750 = vmatpush2.bf16.msra.mxu0 0
        %751 = vmatprep.subr.bf16.mxu0 0
        %752 = vmatpush2.bf16.msra.mxu0 0
        %753 = vmatprep.subr.bf16.mxu0 0
        %754 = vmatpush2.bf16.msra.mxu0 0
        %755 = vmatprep.subr.bf16.mxu0 0
        %756 = vmatpush2.bf16.msra.mxu0 0
        %757 = vmatprep.subr.bf16.mxu0 0
        %758 = vmatpush2.bf16.msra.mxu0 0
        %759 = vmatprep.subr.bf16.mxu0 0
        %760 = vmatpush2.bf16.msra.mxu0 0
        %761 = vmatprep.subr.bf16.mxu0 0
        %762 = vmatpush2.bf16.msra.mxu0 0
        %763 = vmatprep.mubr.bf16.mxu0 0
        %764 = vmatmul.mubr.bf16.gmra.mxu0 %v688
        %v765 = vpop.f32.mrf.mxu0
        %v766 = vadd.f32 %v685, %v765
        %v767 = vpop.f32.mrf.mxu0
        %v768 = vadd.f32 %v685, %v767
        %v769 = vpop.f32.mrf.mxu0
        %v770 = vpop.f32.mrf.mxu0
        %771 = vdwg.mxu0
        %v776 = vcombine.low %v725, %v727
        %v777 = vcombine.low %v766, %v768
        %v779 = vunpack.c.l.s4 1983009808
        %v780 = vunpack.c.0.s8 %v779
        %v781 = vlaneseq
        %v782 = vshrl.u32 %v781, 7
        %v783 = vsub.s32 %v780, %v782
        %v784 = vrot.slane %v776, %v783
        %v786 = vunpack.c.l.s4 1983009808
        %v787 = vunpack.c.0.s8 %v786
        %v788 = vlaneseq
        %v789 = vshrl.u32 %v788, 7
        %v790 = vsub.s32 %v787, %v789
        %v791 = vrot.slane %v777, %v790
        %v792 = vcombine.low %v784, %v791
        %794 = vst [vmem:[%s302] sm:$0xff] %v792
        %s795 = sand.u32 %s181, 1
        %s796 = scalar_lea.sflag [#allocation4], %s795
        %s797 = sand.u32 %s181, 1
        %s798 = smul.addr %s797, 8
        %s799 = scalar_lea.vmem [#allocation3], %s798
        // Predicated region
        $region72: #{mlp_forward.1} parent=66 // pred_check
          %p800 = pneg %p191
        $region73: #{mlp_forward.1} parent=66 // pred_check_branch
          %802 = sbr.rel (%p800) target = $region75
        $region74: #{mlp_forward.1} parent=66 // pred_region
          %s803 = smul.u32 4, %s21
          %s805 = ssub.s32 128, 128
          %806 = vsyncadd %s796, %s805
          %s807 = smul.addr %s803, 32
          %s808 = scalar_lea.hbm %s7, %s807
          %s810 = sshll.u32 %s799, 4
          %s811 = int_to_ptr.vmem [resolvable:$true] %s810
          %813 = dma.vmem_to_hbm [thread:$0]  %s811, 128, %s808, %s796
        $region75: #{mlp_forward.1} parent=66 // pred_fallthru
          _
      $region67: #{mlp_forward.1} parent=5 // pred_fallthru
        _
      %p814 = scmp.le.s32.totalorder 2, %s16
      // Predicated region
      $region76: #{mlp_forward.1} parent=5 // pred_check
        %p815 = pneg %p814
      $region77: #{mlp_forward.1} parent=5 // pred_check_branch
        %817 = sbr.rel (%p815) target = $region79
      $region78: #{mlp_forward.1} parent=5 // pred_region
        %s818 = ssub.s32 %s16, 2
        // Predicated region
        $region80: #{mlp_forward.1} parent=78 // pred_check
          %p819 = pneg %p197
        $region81: #{mlp_forward.1} parent=78 // pred_check_branch
          %821 = sbr.rel (%p819) target = $region83
        $region82: #{mlp_forward.1} parent=78 // pred_region
          %s822 = sand.u32 %s182, 1
          %s823 = scalar_lea.sflag [#allocation4], %s822
          %s824 = sand.u32 %s182, 1
          %s825 = smul.addr %s824, 8
          %s826 = scalar_lea.vmem [#allocation3], %s825
          %827 = dma.done %s823, 128
        $region83: #{mlp_forward.1} parent=78 // pred_fallthru
          _
      $region79: #{mlp_forward.1} parent=5 // pred_fallthru
        _
    $region6: #{mlp_forward.1} parent=1 // loop_footer
      %s20 = sadd.s32 1, %s16
    $region7: #{mlp_forward.1} parent=1 // loop_footer_branch
      %15 = sbr.rel target = $region3
    $region8: #{mlp_forward.1} parent=1 // loop_exit
      _
    %828 = vsyncpa [#allocation4], 1
    %s829 = scalar_lea.sflag [#allocation4], 1
    %830 = vsyncpa %s829, 1

</llo_original>
